<compile_context>
chip_gen: v7x
topology: tpu7x:2x2x1
jax: 0.10.0
libtpu: 0.0.40
codegen_flags: <defaults>
</compile_context>

<pallas_src>
import jax
import jax.numpy as jnp
from jax.experimental import pallas as pl
from jax.experimental.pallas import tpu as pltpu


def _round_up(x, m):
    return ((x + m - 1) // m) * m


def _conv1x1_kernel(x_ref, w_ref, b_ref, o_ref):
    # x_ref: (Cin, TM), w_ref: (Cout, Cin), b_ref: (Cout, 1), o_ref: (Cout, TM)
    acc = jnp.dot(w_ref[...], x_ref[...], preferred_element_type=jnp.float32)
    o_ref[...] = (acc + b_ref[...].astype(jnp.float32)).astype(o_ref.dtype)


def _choose_tile(hw, n, tm_max):
    """Pick (tm, grid_m) for the M = H*W axis."""
    if hw <= tm_max:
        # Ensure >= 2 M-tiles when N == 1 and there is enough work, so v7x's
        # two TensorCores both get a "parallel" slice.  Tiles stay large.
        if n == 1 and hw >= 2048:
            tm = min(_round_up(pl.cdiv(hw, 2), 128), tm_max)
            return tm, pl.cdiv(hw, tm)
        return hw, 1                     # full extent: always a legal block
    tm = tm_max                          # multiple of 128 by construction
    return tm, pl.cdiv(hw, tm)           # Pallas masks the ragged last tile


def conv2d_1x1(x_nchw, weight, bias, *, tm_max=8192, small_hw_threshold=512):
    """1x1 conv, stride 1, no padding.

    x_nchw: (N, Cin, H, W)
    weight: (Cout, Cin, 1, 1)
    bias:   (Cout,)
    returns (N, Cout, H, W) in x's dtype.
    """
    n, cin, h, w = x_nchw.shape
    cout = weight.shape[0]
    hw = h * w

    w2d = weight.reshape(cout, cin)          # (Cout, Cin)

    # Tiny spatial extents (incl. the module's literal 1x1): let XLA fuse it.
    if hw < small_hw_threshold:
        out = jnp.einsum("nchw,oc->nohw", x_nchw, w2d) + bias.reshape(1, cout, 1, 1)
        return out.astype(x_nchw.dtype)

    # Free reshapes only — no transposes.
    x3d = x_nchw.reshape(n, cin, hw)          # (N, Cin, M)
    b2d = bias.reshape(cout, 1)               # (Cout, 1)

    tm, grid_m = _choose_tile(hw, n, tm_max)

    out3d = pl.pallas_call(
        _conv1x1_kernel,
        out_shape=jax.ShapeDtypeStruct((n, cout, hw), x_nchw.dtype),
        grid_spec=pltpu.PrefetchScalarGridSpec(
            num_scalar_prefetch=0,
            grid=(n, grid_m),
            in_specs=[
                # batch dim squeezed out of the kernel view; M tiled.
                pl.BlockSpec((None, cin, tm), lambda b, m: (b, 0, m)),
                # weights / bias: VMEM-resident across the whole grid.
                pl.BlockSpec((cout, cin), lambda b, m: (0, 0)),
                pl.BlockSpec((cout, 1), lambda b, m: (0, 0)),
            ],
            out_specs=pl.BlockSpec((None, cout, tm), lambda b, m: (b, 0, m)),
        ),
        compiler_params=pltpu.CompilerParams(
            # Both axes independent -> megacore / dual-TC sharding on v7x.
            dimension_semantics=("parallel", "parallel"),
            # Explicit limit (v5e scoped default is 16 MiB); TM=8192 uses ~6 MiB
            # double-buffered, well under 32 MiB on every chip incl. v7x.
            vmem_limit_bytes=32 * 1024 * 1024,
        ),
    )(x3d, w2d, b2d)

    # Straight back to NCHW — still just a reshape, no transpose.
    return out3d.reshape(n, cout, h, w)


def _ref_conv1x1(x_nchw, weight, bias):
    cout, cin = weight.shape[0], weight.shape[1]
    return (jnp.einsum("nchw,oc->nohw", x_nchw, weight.reshape(cout, cin))
            + bias.reshape(1, cout, 1, 1))


if __name__ == "__main__":
    key = jax.random.PRNGKey(0)
    kx, kw, kb, kx2, kx3 = jax.random.split(key, 5)

    cin, cout = 72, 24
    # Deterministic parameter init (PyTorch default-style uniform bound).
    fan_in = cin * 1 * 1
    bound = 1.0 / (fan_in ** 0.5)
    weight = jax.random.uniform(kw, (cout, cin, 1, 1), jnp.float32, -bound, bound)
    bias = jax.random.uniform(kb, (cout,), jnp.float32, -bound, bound)

    # 1) Literal module shape: [1, 72, 1, 1] -> [1, 24, 1, 1] (einsum fast path).
    x33 = jax.random.normal(kx, (1, cin, 1, 1), dtype=jnp.float32)
    x34 = conv2d_1x1(x33, weight, bias)
    jax.block_until_ready(x34)
    assert x34.shape == (1, cout, 1, 1)
    assert jnp.allclose(x34, _ref_conv1x1(x33, weight, bias), atol=1e-5, rtol=1e-5)

    # 2) Larger spatial extent -> Pallas path, hw=4096 split into 2 tiles of
    #    2048 (exercises the N==1 dual-TC split + pipelined DMA).
    x_big = jax.random.normal(kx2, (1, cin, 64, 64), dtype=jnp.float32)
    y_big = conv2d_1x1(x_big, weight, bias)
    jax.block_until_ready(y_big)
    assert y_big.shape == (1, cout, 64, 64)
    assert jnp.allclose(y_big, _ref_conv1x1(x_big, weight, bias),
                        atol=1e-4, rtol=1e-4)

    # 3) Ragged spatial extent -> Pallas path, hw=3600, tm=1920, grid_m=2 with
    #    a masked partial last tile (safe: no reduction over M).
    x_rag = jax.random.normal(kx3, (1, cin, 60, 60), dtype=jnp.float32)
    y_rag = conv2d_1x1(x_rag, weight, bias)
    jax.block_until_ready(y_rag)
    assert y_rag.shape == (1, cout, 60, 60)
    assert jnp.allclose(y_rag, _ref_conv1x1(x_rag, weight, bias),
                        atol=1e-4, rtol=1e-4)

    print("KERNEL_OK")
</pallas_src>

<mosaic_0001>
module attributes {stable_mosaic.version = 11 : i64} {
  func.func @_conv1x1_kernel(%arg0: i32, %arg1: i32, %arg2: memref<1x72x2048xf32, #tpu.memory_space<vmem>>, %arg3: memref<24x72xf32, #tpu.memory_space<vmem>>, %arg4: memref<24x1xf32, #tpu.memory_space<vmem>>, %arg5: memref<1x24x2048xf32, #tpu.memory_space<vmem>>) attributes {dimension_semantics = [#tpu.dimension_semantics<parallel>, #tpu.dimension_semantics<parallel>], iteration_bounds = array<i64: 1, 2>, scalar_prefetch = 0 : i64, scratch_operands = 0 : i64, tpu.core_type = #tpu.core_type<tc>, window_params = [{transform_indices = @transform_0, window_bounds = array<i64: 1, 72, 2048>}, {pipeline_mode = #tpu.pipeline_mode<synchronous>, transform_indices = @transform_1, window_bounds = array<i64: 24, 72>}, {pipeline_mode = #tpu.pipeline_mode<synchronous>, transform_indices = @transform_2, window_bounds = array<i64: 24, 1>}, {transform_indices = @transform_3, window_bounds = array<i64: 1, 24, 2048>}]} {
    %c0 = arith.constant 0 : index
    %c0_0 = arith.constant 0 : index
    %0 = vector.load %arg3[%c0, %c0_0] : memref<24x72xf32, #tpu.memory_space<vmem>>, vector<24x72xf32>
    %c0_1 = arith.constant 0 : index
    %c0_2 = arith.constant 0 : index
    %c0_3 = arith.constant 0 : index
    %1 = vector.load %arg2[%c0_1, %c0_2, %c0_3] : memref<1x72x2048xf32, #tpu.memory_space<vmem>>, vector<1x72x2048xf32>
    %2 = vector.shape_cast %1 : vector<1x72x2048xf32> to vector<72x2048xf32>
    %cst = arith.constant dense<0.000000e+00> : vector<24x2048xf32>
    %3 = tpu.matmul %0, %2, %cst {dimension_numbers = #tpu.dot_dimension_numbers<[1], [0], [0], [1], [0, 0, 1, 1], [], []>} : vector<24x72xf32>, vector<72x2048xf32>, vector<24x2048xf32> -> vector<24x2048xf32>
    %c0_4 = arith.constant 0 : index
    %c0_5 = arith.constant 0 : index
    %4 = vector.load %arg4[%c0_4, %c0_5] : memref<24x1xf32, #tpu.memory_space<vmem>>, vector<24x1xf32>
    %5 = vector.broadcast %4 : vector<24x1xf32> to vector<24x2048xf32>
    %6 = arith.addf %3, %5 : vector<24x2048xf32>
    %c0_6 = arith.constant 0 : index
    %c0_7 = arith.constant 0 : index
    %c0_8 = arith.constant 0 : index
    %7 = vector.load %arg5[%c0_6, %c0_7, %c0_8] : memref<1x24x2048xf32, #tpu.memory_space<vmem>>, vector<1x24x2048xf32>
    %8 = vector.shape_cast %7 : vector<1x24x2048xf32> to vector<24x2048xf32>
    %9 = vector.shape_cast %6 : vector<24x2048xf32> to vector<1x24x2048xf32>
    tpu.vector_store %arg5[%c0_6, %c0_7, %c0_8], %9 {strides = array<i32>} : memref<1x24x2048xf32, #tpu.memory_space<vmem>>, vector<1x24x2048xf32>,
    return
  }
  func.func @transform_0(%arg0: i32, %arg1: i32) -> (i32, i32, i32) {
    %c0_i32 = arith.constant 0 : i32
    %c0_i32_0 = arith.constant 0 : i32
    return %arg0, %c0_i32, %arg1 : i32, i32, i32
  }
  func.func @transform_1(%arg0: i32, %arg1: i32) -> (i32, i32) {
    %c0_i32 = arith.constant 0 : i32
    %c0_i32_0 = arith.constant 0 : i32
    %c0_i32_1 = arith.constant 0 : i32
    return %c0_i32, %c0_i32_0 : i32, i32
  }
  func.func @transform_2(%arg0: i32, %arg1: i32) -> (i32, i32) {
    %c0_i32 = arith.constant 0 : i32
    %c0_i32_0 = arith.constant 0 : i32
    %c0_i32_1 = arith.constant 0 : i32
    return %c0_i32, %c0_i32_0 : i32, i32
  }
  func.func @transform_3(%arg0: i32, %arg1: i32) -> (i32, i32, i32) {
    %c0_i32 = arith.constant 0 : i32
    %c0_i32_0 = arith.constant 0 : i32
    return %arg0, %c0_i32, %arg1 : i32, i32, i32
  }
}

</mosaic_0001>

<llo_original>
// kernel: tpu_custom_call.1
$region0: #{tpu_custom_call.1}
  #allocation0 [shape = 'u32[]', space=smem, size = 0x4, offset = 0x4, fixed_abs, tag = 'smem constant byte address 0x4 - core index']
  #allocation1 [shape = 'u32[144,128]{1,0:T(1,128)}', space=vmem, size = 0x12000, scoped, tag = 'internal scratch']
  %s0 = inlined_call_operand.hbm [shape: f32[1,72,4096], index: 0, kind: input, shape index: {}]
  %s1 = inlined_call_operand.hbm [shape: f32[24,72], index: 1, kind: input, shape index: {}]
  %s2 = inlined_call_operand.vmem [shape: f32[24,1], index: 2, kind: input, shape index: {}]
  %s3 = inlined_call_operand.hbm [shape: f32[1,24,4096], index: 3, kind: output, shape index: {}]
  %s4 = sld [smem:[#allocation0]]
  $region53: #{tpu_custom_call.1} parent=0
    _
  %s6 = ssub.s32 1, %s4
  %s7 = scalar_select 0, %s6, %s4
  $region1: #{tpu_custom_call.1} parent=0
    #allocation2 [shape = 'u8[1179648]{0}', space=vmem, size = 0x120000, scoped, tag = 'input window, operand 0']
    #allocation3 [shape = 's32[2]{0}', space=sflag, size = 0x8, scoped, tag = 'scoped memory for tpu_custom_call.1']
    #allocation4 [shape = 's32[2]{0}', space=sflag, size = 0x8, scoped, tag = 'scoped memory for tpu_custom_call.1']
    #allocation5 [shape = 'u8[12288]{0}', space=vmem, size = 0x3000, scoped, tag = 'input window, operand 1, single buffered']
    #allocation6 [shape = 's32[1]{0}', space=sflag, size = 0x4, scoped, tag = 'scoped memory for tpu_custom_call.1']
    #allocation7 [shape = 'u8[393216]{0}', space=vmem, size = 0x60000, scoped, tag = 'output window, operand 0']
    %8 = vsyncpa [#allocation3], 0
    %s9 = scalar_lea.sflag [#allocation3], 1
    %10 = vsyncpa %s9, 0
    %11 = vsyncpa [#allocation6], 0
    %12 = vsyncpa [#allocation4], 0
    %s13 = scalar_lea.sflag [#allocation4], 1
    %14 = vsyncpa %s13, 0
    loop: start=0, step=1, limit=4
    $region2: #{tpu_custom_call.1} parent=1 // loop_pre_header
      _
    $region3: #{tpu_custom_call.1} parent=1 // loop_header
      %s16 = sphi 0, %s20
      %p17 = scmp.ge.s32.totalorder %s16, 4
      %s23 = sphi 0, %s35
      %s24 = sphi 0, %s31
      %s25 = sphi 0, %s23
      %s26 = sphi 0, %s24
      %s27 = sphi 0, %s25
      %s28 = sphi 0, %s26
      %s40 = sphi 0, %s42
      %s43 = sphi 0, %s40
      %s44 = sphi 0, %s43
      %s60 = sphi 0, %s44
      %s64 = sphi 0, %s64
      %s66 = sphi 0, %s64
      %s67 = sphi 0, %s66
      %s81 = sphi 0, %s67
      %s85 = sphi 0, %s85
      %s87 = sphi 0, %s85
      %s88 = sphi 0, %s87
      %s102 = sphi 0, %s88
      %s110 = sphi 0, %s112
      %s113 = sphi 0, %s110
      %s114 = sphi 0, %s113
      %s130 = sphi 0, %s114
    $region4: #{tpu_custom_call.1} parent=1 // loop_header_branch
      %19 = sbr.rel (%p17) target = $region8
    $region5: #{tpu_custom_call.1} parent=1 // loop_body
      %s21 = ssub.s32 %s16, 1
      %s22 = ssub.s32 %s16, 2
      %s29 = sadd.s32 1, %s24
      %p30 = scmp.ge.s32.totalorder %s29, 2
      %s31 = scalar_select %p30, 0, %s29
      %s32 = sadd.s32 1, %s23
      %s33 = scalar_select %p30, %s32, %s23
      %p34 = scmp.ge.s32.totalorder %s33, 1
      %s35 = scalar_select %p34, 0, %s33
      %s36 = ssub.s32 %s23, %s35
      %s37 = ssub.s32 %s24, %s31
      %s38 = sor.u32 %s36, %s37
      %p39 = scmp.eq.s32.totalorder %s38, 0
      %s41 = sadd.s32 %s40, 1
      %s42 = scalar_select %p39, %s40, %s41
      %p45 = pneg %p39
      %p46 = scmp.eq.s32.totalorder %s16, 1
      %p47 = por %p45, %p46
      %p48 = scmp.ne.s32.totalorder %s40, %s43
      %p49 = scmp.eq.s32.totalorder %s16, 0
      %p50 = por %p48, %p49
      %p51 = scmp.ne.s32.totalorder %s40, %s43
      %p52 = scmp.eq.s32.totalorder %s21, 1
      %p53 = por %p51, %p52
      %p54 = scmp.ne.s32.totalorder %s43, %s44
      %p55 = scmp.eq.s32.totalorder %s21, 0
      %p56 = por %p54, %p55
      %p57 = scmp.ne.s32.totalorder %s43, %s44
      %p58 = scmp.eq.s32.totalorder %s22, 1
      %p59 = por %p57, %p58
      %p61 = scmp.ne.s32.totalorder %s44, %s60
      %p62 = scmp.eq.s32.totalorder %s22, 0
      %p63 = por %p61, %p62
      %s65 = sadd.s32 %s64, 1
      %p68 = scmp.eq.s32.totalorder %s16, 1
      %p69 = scmp.ne.s32.totalorder %s64, %s66
      %p70 = scmp.eq.s32.totalorder %s16, 0
      %p71 = por %p69, %p70
      %p72 = scmp.ne.s32.totalorder %s64, %s66
      %p73 = scmp.eq.s32.totalorder %s21, 1
      %p74 = por %p72, %p73
      %p75 = scmp.ne.s32.totalorder %s66, %s67
      %p76 = scmp.eq.s32.totalorder %s21, 0
      %p77 = por %p75, %p76
      %p78 = scmp.ne.s32.totalorder %s66, %s67
      %p79 = scmp.eq.s32.totalorder %s22, 1
      %p80 = por %p78, %p79
      %p82 = scmp.ne.s32.totalorder %s67, %s81
      %p83 = scmp.eq.s32.totalorder %s22, 0
      %p84 = por %p82, %p83
      %s86 = sadd.s32 %s85, 1
      %p89 = scmp.eq.s32.totalorder %s16, 1
      %p90 = scmp.ne.s32.totalorder %s85, %s87
      %p91 = scmp.eq.s32.totalorder %s16, 0
      %p92 = por %p90, %p91
      %p93 = scmp.ne.s32.totalorder %s85, %s87
      %p94 = scmp.eq.s32.totalorder %s21, 1
      %p95 = por %p93, %p94
      %p96 = scmp.ne.s32.totalorder %s87, %s88
      %p97 = scmp.eq.s32.totalorder %s21, 0
      %p98 = por %p96, %p97
      %p99 = scmp.ne.s32.totalorder %s87, %s88
      %p100 = scmp.eq.s32.totalorder %s22, 1
      %p101 = por %p99, %p100
      %p103 = scmp.ne.s32.totalorder %s88, %s102
      %p104 = scmp.eq.s32.totalorder %s22, 0
      %p105 = por %p103, %p104
      %s106 = ssub.s32 %s23, %s35
      %s107 = ssub.s32 %s24, %s31
      %s108 = sor.u32 %s106, %s107
      %p109 = scmp.eq.s32.totalorder %s108, 0
      %s111 = sadd.s32 %s110, 1
      %s112 = scalar_select %p109, %s110, %s111
      %p115 = pneg %p109
      %p116 = scmp.eq.s32.totalorder %s16, 1
      %p117 = por %p115, %p116
      %p118 = scmp.ne.s32.totalorder %s110, %s113
      %p119 = scmp.eq.s32.totalorder %s16, 0
      %p120 = por %p118, %p119
      %p121 = scmp.ne.s32.totalorder %s110, %s113
      %p122 = scmp.eq.s32.totalorder %s21, 1
      %p123 = por %p121, %p122
      %p124 = scmp.ne.s32.totalorder %s113, %s114
      %p125 = scmp.eq.s32.totalorder %s21, 0
      %p126 = por %p124, %p125
      %p127 = scmp.ne.s32.totalorder %s113, %s114
      %p128 = scmp.eq.s32.totalorder %s22, 1
      %p129 = por %p127, %p128
      %p131 = scmp.ne.s32.totalorder %s114, %s130
      %p132 = scmp.eq.s32.totalorder %s22, 0
      %p133 = por %p131, %p132
      %p134 = scmp.le.s32.totalorder 1, %s16
      %p135 = scmp.lt.s32.totalorder %s16, 3
      %p136 = pnand %p134, %p135
      %p137 = pneg %p136
      // Predicated region
      $region9: #{tpu_custom_call.1} parent=5 // pred_check
        _
      $region10: #{tpu_custom_call.1} parent=5 // pred_check_branch
        %139 = sbr.rel (%p136) target = $region12
      $region11: #{tpu_custom_call.1} parent=5 // pred_region
        %s140 = ssub.s32 %s16, 1
        // Predicated region
        $region13: #{tpu_custom_call.1} parent=11 // pred_check
          %p141 = pneg %p77
        $region14: #{tpu_custom_call.1} parent=11 // pred_check_branch
          %143 = sbr.rel (%p141) target = $region16
        $region15: #{tpu_custom_call.1} parent=11 // pred_region
          %s145 = ssub.s32 384, 384
          %146 = vsyncadd [#allocation6], %s145
          %s147 = sshll.u32 [#allocation5], 4
          %s148 = int_to_ptr.vmem [resolvable:$true] %s147
          %153 = dma.hbm_to_vmem [thread:$0]  %s1, 384, %s148, [#allocation6], 128, 128, 8
        $region16: #{tpu_custom_call.1} parent=11 // pred_fallthru
          _
        // Predicated region
        $region17: #{tpu_custom_call.1} parent=11 // pred_check
          %p154 = pneg %p98
        $region18: #{tpu_custom_call.1} parent=11 // pred_check_branch
          %156 = sbr.rel (%p154) target = $region20
        $region19: #{tpu_custom_call.1} parent=11 // pred_region
          _
        $region20: #{tpu_custom_call.1} parent=11 // pred_fallthru
          _
      $region12: #{tpu_custom_call.1} parent=5 // pred_fallthru
        _
      %p157 = scmp.lt.s32.totalorder %s16, 2
      // Predicated region
      $region21: #{tpu_custom_call.1} parent=5 // pred_check
        %p158 = pneg %p157
      $region22: #{tpu_custom_call.1} parent=5 // pred_check_branch
        %160 = sbr.rel (%p158) target = $region24
      $region23: #{tpu_custom_call.1} parent=5 // pred_region
        // Predicated region
        $region25: #{tpu_custom_call.1} parent=23 // pred_check
          %p161 = pneg %p50
        $region26: #{tpu_custom_call.1} parent=23 // pred_check_branch
          %163 = sbr.rel (%p161) target = $region28
        $region27: #{tpu_custom_call.1} parent=23 // pred_region
          %s164 = sand.u32 %s40, 1
          %s165 = scalar_lea.sflag [#allocation3], %s164
          %s166 = sand.u32 %s40, 1
          %s167 = smul.addr %s166, 1152
          %s168 = scalar_lea.vmem [#allocation2], %s167
          %s169 = smul.u32 16, %s24
          %s171 = ssub.s32 18432, 18432
          %172 = vsyncadd %s165, %s171
          %s173 = smul.addr %s23, 288
          %s174 = sadd.s32 %s169, %s173
          %s175 = smul.addr %s174, 128
          %s176 = scalar_lea.hbm %s0, %s175
          %s177 = sshll.u32 %s168, 4
          %s178 = int_to_ptr.vmem [resolvable:$true] %s177
          %183 = dma.hbm_to_vmem [thread:$0]  %s176, 18432, %s178, %s165, 4096, 2048, 128
        $region28: #{tpu_custom_call.1} parent=23 // pred_fallthru
          _
      $region24: #{tpu_custom_call.1} parent=5 // pred_fallthru
        _
      %p184 = scmp.le.s32.totalorder 1, %s16
      %p185 = scmp.lt.s32.totalorder %s16, 3
      %p186 = pnand %p184, %p185
      %p187 = pneg %p186
      // Predicated region
      $region29: #{tpu_custom_call.1} parent=5 // pred_check
        _
      $region30: #{tpu_custom_call.1} parent=5 // pred_check_branch
        %189 = sbr.rel (%p186) target = $region32
      $region31: #{tpu_custom_call.1} parent=5 // pred_region
        %s190 = ssub.s32 %s16, 1
        %s191 = sand.u32 %s43, 1
        %s192 = scalar_lea.sflag [#allocation3], %s191
        %s193 = sand.u32 %s43, 1
        %s194 = smul.addr %s193, 1152
        %s195 = scalar_lea.vmem [#allocation2], %s194
        // Predicated region
        $region33: #{tpu_custom_call.1} parent=31 // pred_check
          %p196 = pneg %p56
        $region34: #{tpu_custom_call.1} parent=31 // pred_check_branch
          %198 = sbr.rel (%p196) target = $region36
        $region35: #{tpu_custom_call.1} parent=31 // pred_region
          %199 = dma.done %s192, 18432
        $region36: #{tpu_custom_call.1} parent=31 // pred_fallthru
          _
        // Predicated region
        $region37: #{tpu_custom_call.1} parent=31 // pred_check
          %p200 = pneg %p77
        $region38: #{tpu_custom_call.1} parent=31 // pred_check_branch
          %202 = sbr.rel (%p200) target = $region40
        $region39: #{tpu_custom_call.1} parent=31 // pred_region
          %203 = dma.done [#allocation6], 384
        $region40: #{tpu_custom_call.1} parent=31 // pred_fallthru
          _
        %s204 = sand.u32 %s43, 1
        %s205 = scalar_lea.sflag [#allocation3], %s204
        %s206 = sand.u32 %s43, 1
        %s207 = smul.addr %s206, 1152
        %s208 = scalar_lea.vmem [#allocation2], %s207
        %p209 = pneg %p56
        %p210 = pneg %p53
        %p211 = pneg %p77
        %p212 = pneg %p74
        %p213 = pneg %p98
        %p214 = pneg %p95
        %p215 = pneg %p126
        %p216 = pneg %p123
        %s217 = sand.u32 %s113, 1
        %s218 = scalar_lea.sflag [#allocation4], %s217
        %s219 = sand.u32 %s113, 1
        %s220 = smul.addr %s219, 384
        %s221 = scalar_lea.vmem [#allocation7], %s220
        %s222 = smul.u32 16, %s26
        %s223 = smul.u32 16, %s26
        %v224 = vld [vmem:[#allocation5] sm:$0xff]
        %v225 = vld [vmem:[#allocation5 + $0x8] sm:$0xff]
        %v226 = vld [vmem:[#allocation5 + $0x10] sm:$0xff]
        %v227 = vld [vmem:[%s195] sm:$0xff]
        %v228 = vld [vmem:[%s195 + $0x8] sm:$0xff]
        %v229 = vld [vmem:[%s195 + $0x10] sm:$0xff]
        %v230 = vld [vmem:[%s195 + $0x18] sm:$0xff]
        %v231 = vld [vmem:[%s195 + $0x20] sm:$0xff]
        %v232 = vld [vmem:[%s195 + $0x28] sm:$0xff]
        %v233 = vld [vmem:[%s195 + $0x30] sm:$0xff]
        %v234 = vld [vmem:[%s195 + $0x38] sm:$0xff]
        %v235 = vld [vmem:[%s195 + $0x40] sm:$0xff]
        %v236 = vld [vmem:[%s195 + $0x48] sm:$0xff]
        %v237 = vld [vmem:[%s195 + $0x50] sm:$0xff]
        %v238 = vld [vmem:[%s195 + $0x58] sm:$0xff]
        %v239 = vld [vmem:[%s195 + $0x60] sm:$0xff]
        %v240 = vld [vmem:[%s195 + $0x68] sm:$0xff]
        %v241 = vld [vmem:[%s195 + $0x70] sm:$0xff]
        %v242 = vld [vmem:[%s195 + $0x78] sm:$0xff]
        %v243 = vld [vmem:[%s195 + $0x80] sm:$0xff]
        %v244 = vld [vmem:[%s195 + $0x88] sm:$0xff]
        %v245 = vld [vmem:[%s195 + $0x90] sm:$0xff]
        %v246 = vld [vmem:[%s195 + $0x98] sm:$0xff]
        %v247 = vld [vmem:[%s195 + $0xa0] sm:$0xff]
        %v248 = vld [vmem:[%s195 + $0xa8] sm:$0xff]
        %v249 = vld [vmem:[%s195 + $0xb0] sm:$0xff]
        %v250 = vld [vmem:[%s195 + $0xb8] sm:$0xff]
        %v251 = vld [vmem:[%s195 + $0xc0] sm:$0xff]
        %v252 = vld [vmem:[%s195 + $0xc8] sm:$0xff]
        %v253 = vld [vmem:[%s195 + $0xd0] sm:$0xff]
        %v254 = vld [vmem:[%s195 + $0xd8] sm:$0xff]
        %v255 = vld [vmem:[%s195 + $0xe0] sm:$0xff]
        %v256 = vld [vmem:[%s195 + $0xe8] sm:$0xff]
        %v257 = vld [vmem:[%s195 + $0xf0] sm:$0xff]
        %v258 = vld [vmem:[%s195 + $0xf8] sm:$0xff]
        %v259 = vld [vmem:[%s195 + $0x100] sm:$0xff]
        %v260 = vld [vmem:[%s195 + $0x108] sm:$0xff]
        %v261 = vld [vmem:[%s195 + $0x110] sm:$0xff]
        %v262 = vld [vmem:[%s195 + $0x118] sm:$0xff]
        %v263 = vld [vmem:[%s195 + $0x120] sm:$0xff]
        %v264 = vld [vmem:[%s195 + $0x128] sm:$0xff]
        %v265 = vld [vmem:[%s195 + $0x130] sm:$0xff]
        %v266 = vld [vmem:[%s195 + $0x138] sm:$0xff]
        %v267 = vld [vmem:[%s195 + $0x140] sm:$0xff]
        %v268 = vld [vmem:[%s195 + $0x148] sm:$0xff]
        %v269 = vld [vmem:[%s195 + $0x150] sm:$0xff]
        %v270 = vld [vmem:[%s195 + $0x158] sm:$0xff]
        %v271 = vld [vmem:[%s195 + $0x160] sm:$0xff]
        %v272 = vld [vmem:[%s195 + $0x168] sm:$0xff]
        %v273 = vld [vmem:[%s195 + $0x170] sm:$0xff]
        %v274 = vld [vmem:[%s195 + $0x178] sm:$0xff]
        %v275 = vld [vmem:[%s195 + $0x180] sm:$0xff]
        %v276 = vld [vmem:[%s195 + $0x188] sm:$0xff]
        %v277 = vld [vmem:[%s195 + $0x190] sm:$0xff]
        %v278 = vld [vmem:[%s195 + $0x198] sm:$0xff]
        %v279 = vld [vmem:[%s195 + $0x1a0] sm:$0xff]
        %v280 = vld [vmem:[%s195 + $0x1a8] sm:$0xff]
        %v281 = vld [vmem:[%s195 + $0x1b0] sm:$0xff]
        %v282 = vld [vmem:[%s195 + $0x1b8] sm:$0xff]
        %v283 = vld [vmem:[%s195 + $0x1c0] sm:$0xff]
        %v284 = vld [vmem:[%s195 + $0x1c8] sm:$0xff]
        %v285 = vld [vmem:[%s195 + $0x1d0] sm:$0xff]
        %v286 = vld [vmem:[%s195 + $0x1d8] sm:$0xff]
        %v287 = vld [vmem:[%s195 + $0x1e0] sm:$0xff]
        %v288 = vld [vmem:[%s195 + $0x1e8] sm:$0xff]
        %v289 = vld [vmem:[%s195 + $0x1f0] sm:$0xff]
        %v290 = vld [vmem:[%s195 + $0x1f8] sm:$0xff]
        %v291 = vld [vmem:[%s195 + $0x200] sm:$0xff]
        %v292 = vld [vmem:[%s195 + $0x208] sm:$0xff]
        %v293 = vld [vmem:[%s195 + $0x210] sm:$0xff]
        %v294 = vld [vmem:[%s195 + $0x218] sm:$0xff]
        %v295 = vld [vmem:[%s195 + $0x220] sm:$0xff]
        %v296 = vld [vmem:[%s195 + $0x228] sm:$0xff]
        %v297 = vld [vmem:[%s195 + $0x230] sm:$0xff]
        %v298 = vld [vmem:[%s195 + $0x238] sm:$0xff]
        %v299 = vld [vmem:[%s195 + $0x240] sm:$0xff]
        %v300 = vld [vmem:[%s195 + $0x248] sm:$0xff]
        %v301 = vld [vmem:[%s195 + $0x250] sm:$0xff]
        %v302 = vld [vmem:[%s195 + $0x258] sm:$0xff]
        %v303 = vld [vmem:[%s195 + $0x260] sm:$0xff]
        %v304 = vld [vmem:[%s195 + $0x268] sm:$0xff]
        %v305 = vld [vmem:[%s195 + $0x270] sm:$0xff]
        %v306 = vld [vmem:[%s195 + $0x278] sm:$0xff]
        %v307 = vld [vmem:[%s195 + $0x280] sm:$0xff]
        %v308 = vld [vmem:[%s195 + $0x288] sm:$0xff]
        %v309 = vld [vmem:[%s195 + $0x290] sm:$0xff]
        %v310 = vld [vmem:[%s195 + $0x298] sm:$0xff]
        %v311 = vld [vmem:[%s195 + $0x2a0] sm:$0xff]
        %v312 = vld [vmem:[%s195 + $0x2a8] sm:$0xff]
        %v313 = vld [vmem:[%s195 + $0x2b0] sm:$0xff]
        %v314 = vld [vmem:[%s195 + $0x2b8] sm:$0xff]
        %v315 = vld [vmem:[%s195 + $0x2c0] sm:$0xff]
        %v316 = vld [vmem:[%s195 + $0x2c8] sm:$0xff]
        %v317 = vld [vmem:[%s195 + $0x2d0] sm:$0xff]
        %v318 = vld [vmem:[%s195 + $0x2d8] sm:$0xff]
        %v319 = vld [vmem:[%s195 + $0x2e0] sm:$0xff]
        %v320 = vld [vmem:[%s195 + $0x2e8] sm:$0xff]
        %v321 = vld [vmem:[%s195 + $0x2f0] sm:$0xff]
        %v322 = vld [vmem:[%s195 + $0x2f8] sm:$0xff]
        %v323 = vld [vmem:[%s195 + $0x300] sm:$0xff]
        %v324 = vld [vmem:[%s195 + $0x308] sm:$0xff]
        %v325 = vld [vmem:[%s195 + $0x310] sm:$0xff]
        %v326 = vld [vmem:[%s195 + $0x318] sm:$0xff]
        %v327 = vld [vmem:[%s195 + $0x320] sm:$0xff]
        %v328 = vld [vmem:[%s195 + $0x328] sm:$0xff]
        %v329 = vld [vmem:[%s195 + $0x330] sm:$0xff]
        %v330 = vld [vmem:[%s195 + $0x338] sm:$0xff]
        %v331 = vld [vmem:[%s195 + $0x340] sm:$0xff]
        %v332 = vld [vmem:[%s195 + $0x348] sm:$0xff]
        %v333 = vld [vmem:[%s195 + $0x350] sm:$0xff]
        %v334 = vld [vmem:[%s195 + $0x358] sm:$0xff]
        %v335 = vld [vmem:[%s195 + $0x360] sm:$0xff]
        %v336 = vld [vmem:[%s195 + $0x368] sm:$0xff]
        %v337 = vld [vmem:[%s195 + $0x370] sm:$0xff]
        %v338 = vld [vmem:[%s195 + $0x378] sm:$0xff]
        %v339 = vld [vmem:[%s195 + $0x380] sm:$0xff]
        %v340 = vld [vmem:[%s195 + $0x388] sm:$0xff]
        %v341 = vld [vmem:[%s195 + $0x390] sm:$0xff]
        %v342 = vld [vmem:[%s195 + $0x398] sm:$0xff]
        %v343 = vld [vmem:[%s195 + $0x3a0] sm:$0xff]
        %v344 = vld [vmem:[%s195 + $0x3a8] sm:$0xff]
        %v345 = vld [vmem:[%s195 + $0x3b0] sm:$0xff]
        %v346 = vld [vmem:[%s195 + $0x3b8] sm:$0xff]
        %v347 = vld [vmem:[%s195 + $0x3c0] sm:$0xff]
        %v348 = vld [vmem:[%s195 + $0x3c8] sm:$0xff]
        %v349 = vld [vmem:[%s195 + $0x3d0] sm:$0xff]
        %v350 = vld [vmem:[%s195 + $0x3d8] sm:$0xff]
        %v351 = vld [vmem:[%s195 + $0x3e0] sm:$0xff]
        %v352 = vld [vmem:[%s195 + $0x3e8] sm:$0xff]
        %v353 = vld [vmem:[%s195 + $0x3f0] sm:$0xff]
        %v354 = vld [vmem:[%s195 + $0x3f8] sm:$0xff]
        %v355 = vld [vmem:[%s195 + $0x400] sm:$0xff]
        %v356 = vld [vmem:[%s195 + $0x408] sm:$0xff]
        %v357 = vld [vmem:[%s195 + $0x410] sm:$0xff]
        %v358 = vld [vmem:[%s195 + $0x418] sm:$0xff]
        %v359 = vld [vmem:[%s195 + $0x420] sm:$0xff]
        %v360 = vld [vmem:[%s195 + $0x428] sm:$0xff]
        %v361 = vld [vmem:[%s195 + $0x430] sm:$0xff]
        %v362 = vld [vmem:[%s195 + $0x438] sm:$0xff]
        %v363 = vld [vmem:[%s195 + $0x440] sm:$0xff]
        %v364 = vld [vmem:[%s195 + $0x448] sm:$0xff]
        %v365 = vld [vmem:[%s195 + $0x450] sm:$0xff]
        %v366 = vld [vmem:[%s195 + $0x458] sm:$0xff]
        %v367 = vld [vmem:[%s195 + $0x460] sm:$0xff]
        %v368 = vld [vmem:[%s195 + $0x468] sm:$0xff]
        %v369 = vld [vmem:[%s195 + $0x470] sm:$0xff]
        %v370 = vld [vmem:[%s195 + $0x478] sm:$0xff]
        %v371 = vld [vmem:[%s2] sm:$0xff]
        %v372 = vld [vmem:[%s2 + $0x8] sm:$0xff]
        %v373 = vld [vmem:[%s2 + $0x10] sm:$0xff]
        %375 = vset.pattern.permute.xlu0 0
        %376 = vperm.xlu0 %375, %v371
        %v377 = vpop.permute.xlu0 %376
        %380 = vset.pattern.permute.xlu0 0
        %381 = vperm.xlu0 %380, %v372
        %v382 = vpop.permute.xlu0 %381
        %385 = vset.pattern.permute.xlu0 0
        %386 = vperm.xlu0 %385, %v373
        %v387 = vpop.permute.xlu0 %386
        %vm389 = vcmask 588800
        %v391 = vsel %vm389, %v224, 0
        %v394 = vsel %vm389, %v225, 0
        %v397 = vsel %vm389, %v226, 0
        %399 = vmatprep.subr.mxu0 %v228
        %400 = vmatpush1.msra.mxu0 %v227
        %401 = vmatprep.subr.mxu0 %v244
        %402 = vmatpush1.msra.mxu0 %v243
        %403 = vmatprep.subr.mxu0 %v260
        %404 = vmatpush1.msra.mxu0 %v259
        %405 = vmatprep.subr.mxu0 %v276
        %406 = vmatpush1.msra.mxu0 %v275
        %407 = vmatprep.subr.mxu0 %v292
        %408 = vmatpush1.msra.mxu0 %v291
        %409 = vmatprep.subr.mxu0 %v308
        %410 = vmatpush1.msra.mxu0 %v307
        %411 = vmatprep.subr.mxu0 %v324
        %412 = vmatpush1.msra.mxu0 %v323
        %413 = vmatprep.subr.mxu0 %v340
        %414 = vmatpush1.msra.mxu0 %v339
        %415 = vmatprep.subr.mxu0 %v356
        %416 = vmatpush1.msra.mxu0 %v355
        %417 = vmatprep.subr.mxu0 0.0
        %418 = vmatpush1.msra.mxu0 0.0
        %419 = vmatprep.subr.mxu0 0.0
        %420 = vmatpush1.msra.mxu0 0.0
        %421 = vmatprep.subr.mxu0 0.0
        %422 = vmatpush1.msra.mxu0 0.0
        %423 = vmatprep.subr.mxu0 0.0
        %424 = vmatpush1.msra.mxu0 0.0
        %425 = vmatprep.subr.mxu0 0.0
        %426 = vmatpush1.msra.mxu0 0.0
        %427 = vmatprep.subr.mxu0 0.0
        %428 = vmatpush1.msra.mxu0 0.0
        %429 = vmatprep.subr.mxu0 0.0
        %430 = vmatpush1.msra.mxu0 0.0
        %431 = vmatprep.subr.mxu0 0.0
        %432 = vmatpush1.msra.mxu0 0.0
        %433 = vmatprep.subr.mxu0 0.0
        %434 = vmatpush1.msra.mxu0 0.0
        %435 = vmatprep.subr.mxu0 0.0
        %436 = vmatpush1.msra.mxu0 0.0
        %437 = vmatprep.subr.mxu0 0.0
        %438 = vmatpush1.msra.mxu0 0.0
        %439 = vmatprep.subr.mxu0 0.0
        %440 = vmatpush1.msra.mxu0 0.0
        %441 = vmatprep.subr.mxu0 0.0
        %442 = vmatpush1.msra.mxu0 0.0
        %443 = vmatprep.subr.mxu0 0.0
        %444 = vmatpush1.msra.mxu0 0.0
        %445 = vmatprep.subr.mxu0 0.0
        %446 = vmatpush1.msra.mxu0 0.0
        %447 = vmatprep.subr.mxu0 0.0
        %448 = vmatpush1.msra.mxu0 0.0
        %449 = vmatprep.subr.mxu0 0.0
        %450 = vmatpush1.msra.mxu0 0.0
        %451 = vmatprep.subr.mxu0 0.0
        %452 = vmatpush1.msra.mxu0 0.0
        %453 = vmatprep.subr.mxu0 0.0
        %454 = vmatpush1.msra.mxu0 0.0
        %455 = vmatprep.subr.mxu0 0.0
        %456 = vmatpush1.msra.mxu0 0.0
        %457 = vmatprep.subr.mxu0 0.0
        %458 = vmatpush1.msra.mxu0 0.0
        %459 = vmatprep.subr.mxu0 0.0
        %460 = vmatpush1.msra.mxu0 0.0
        %461 = vmatprep.subr.mxu0 0.0
        %462 = vmatpush1.msra.mxu0 0.0
        %463 = vmatprep.mubr.f32.mxu0 0.0
        %464 = vmatmul.mubr.f32.gmra.mrb[0].mxu0 %v391
        %v465 = vpop.f32.mrb[0].mxu0
        %v466 = vadd.f32 %v377, %v465
        %v467 = vpop.f32.mrb[0].mxu0
        %v468 = vadd.f32 %v377, %v467
        %469 = vmatprep.mubr.f32.mxu0 0.0
        %470 = vmatmul.mubr.f32.gmra.mrb[0].mxu0 %v394
        %v471 = vpop.f32.mrb[0].mxu0
        %v472 = vadd.f32 %v382, %v471
        %v473 = vpop.f32.mrb[0].mxu0
        %v474 = vadd.f32 %v382, %v473
        %475 = vmatprep.mubr.f32.mxu0 0.0
        %476 = vmatmul.mubr.f32.gmra.mrb[0].mxu0 %v397
        %v477 = vpop.f32.mrb[0].mxu0
        %v478 = vadd.f32 %v387, %v477
        %v479 = vpop.f32.mrb[0].mxu0
        %v480 = vadd.f32 %v387, %v479
        %481 = vdwg.mxu0
        %482 = vmatprep.subr.mxu0 %v230
        %483 = vmatpush1.msra.mxu0 %v229
        %484 = vmatprep.subr.mxu0 %v246
        %485 = vmatpush1.msra.mxu0 %v245
        %486 = vmatprep.subr.mxu0 %v262
        %487 = vmatpush1.msra.mxu0 %v261
        %488 = vmatprep.subr.mxu0 %v278
        %489 = vmatpush1.msra.mxu0 %v277
        %490 = vmatprep.subr.mxu0 %v294
        %491 = vmatpush1.msra.mxu0 %v293
        %492 = vmatprep.subr.mxu0 %v310
        %493 = vmatpush1.msra.mxu0 %v309
        %494 = vmatprep.subr.mxu0 %v326
        %495 = vmatpush1.msra.mxu0 %v325
        %496 = vmatprep.subr.mxu0 %v342
        %497 = vmatpush1.msra.mxu0 %v341
        %498 = vmatprep.subr.mxu0 %v358
        %499 = vmatpush1.msra.mxu0 %v357
        %500 = vmatprep.subr.mxu0 0.0
        %501 = vmatpush1.msra.mxu0 0.0
        %502 = vmatprep.subr.mxu0 0.0
        %503 = vmatpush1.msra.mxu0 0.0
        %504 = vmatprep.subr.mxu0 0.0
        %505 = vmatpush1.msra.mxu0 0.0
        %506 = vmatprep.subr.mxu0 0.0
        %507 = vmatpush1.msra.mxu0 0.0
        %508 = vmatprep.subr.mxu0 0.0
        %509 = vmatpush1.msra.mxu0 0.0
        %510 = vmatprep.subr.mxu0 0.0
        %511 = vmatpush1.msra.mxu0 0.0
        %512 = vmatprep.subr.mxu0 0.0
        %513 = vmatpush1.msra.mxu0 0.0
        %514 = vmatprep.subr.mxu0 0.0
        %515 = vmatpush1.msra.mxu0 0.0
        %516 = vmatprep.subr.mxu0 0.0
        %517 = vmatpush1.msra.mxu0 0.0
        %518 = vmatprep.subr.mxu0 0.0
        %519 = vmatpush1.msra.mxu0 0.0
        %520 = vmatprep.subr.mxu0 0.0
        %521 = vmatpush1.msra.mxu0 0.0
        %522 = vmatprep.subr.mxu0 0.0
        %523 = vmatpush1.msra.mxu0 0.0
        %524 = vmatprep.subr.mxu0 0.0
        %525 = vmatpush1.msra.mxu0 0.0
        %526 = vmatprep.subr.mxu0 0.0
        %527 = vmatpush1.msra.mxu0 0.0
        %528 = vmatprep.subr.mxu0 0.0
        %529 = vmatpush1.msra.mxu0 0.0
        %530 = vmatprep.subr.mxu0 0.0
        %531 = vmatpush1.msra.mxu0 0.0
        %532 = vmatprep.subr.mxu0 0.0
        %533 = vmatpush1.msra.mxu0 0.0
        %534 = vmatprep.subr.mxu0 0.0
        %535 = vmatpush1.msra.mxu0 0.0
        %536 = vmatprep.subr.mxu0 0.0
        %537 = vmatpush1.msra.mxu0 0.0
        %538 = vmatprep.subr.mxu0 0.0
        %539 = vmatpush1.msra.mxu0 0.0
        %540 = vmatprep.subr.mxu0 0.0
        %541 = vmatpush1.msra.mxu0 0.0
        %542 = vmatprep.subr.mxu0 0.0
        %543 = vmatpush1.msra.mxu0 0.0
        %544 = vmatprep.subr.mxu0 0.0
        %545 = vmatpush1.msra.mxu0 0.0
        %546 = vmatprep.mubr.f32.mxu0 0.0
        %547 = vmatmul.mubr.f32.gmra.mrb[0].mxu0 %v391
        %v548 = vpop.f32.mrb[0].mxu0
        %v549 = vadd.f32 %v377, %v548
        %v550 = vpop.f32.mrb[0].mxu0
        %v551 = vadd.f32 %v377, %v550
        %552 = vmatprep.mubr.f32.mxu0 0.0
        %553 = vmatmul.mubr.f32.gmra.mrb[0].mxu0 %v394
        %v554 = vpop.f32.mrb[0].mxu0
        %v555 = vadd.f32 %v382, %v554
        %v556 = vpop.f32.mrb[0].mxu0
        %v557 = vadd.f32 %v382, %v556
        %558 = vmatprep.mubr.f32.mxu0 0.0
        %559 = vmatmul.mubr.f32.gmra.mrb[0].mxu0 %v397
        %v560 = vpop.f32.mrb[0].mxu0
        %v561 = vadd.f32 %v387, %v560
        %v562 = vpop.f32.mrb[0].mxu0
        %v563 = vadd.f32 %v387, %v562
        %564 = vdwg.mxu0
        %565 = vmatprep.subr.mxu0 %v232
        %566 = vmatpush1.msra.mxu0 %v231
        %567 = vmatprep.subr.mxu0 %v248
        %568 = vmatpush1.msra.mxu0 %v247
        %569 = vmatprep.subr.mxu0 %v264
        %570 = vmatpush1.msra.mxu0 %v263
        %571 = vmatprep.subr.mxu0 %v280
        %572 = vmatpush1.msra.mxu0 %v279
        %573 = vmatprep.subr.mxu0 %v296
        %574 = vmatpush1.msra.mxu0 %v295
        %575 = vmatprep.subr.mxu0 %v312
        %576 = vmatpush1.msra.mxu0 %v311
        %577 = vmatprep.subr.mxu0 %v328
        %578 = vmatpush1.msra.mxu0 %v327
        %579 = vmatprep.subr.mxu0 %v344
        %580 = vmatpush1.msra.mxu0 %v343
        %581 = vmatprep.subr.mxu0 %v360
        %582 = vmatpush1.msra.mxu0 %v359
        %583 = vmatprep.subr.mxu0 0.0
        %584 = vmatpush1.msra.mxu0 0.0
        %585 = vmatprep.subr.mxu0 0.0
        %586 = vmatpush1.msra.mxu0 0.0
        %587 = vmatprep.subr.mxu0 0.0
        %588 = vmatpush1.msra.mxu0 0.0
        %589 = vmatprep.subr.mxu0 0.0
        %590 = vmatpush1.msra.mxu0 0.0
        %591 = vmatprep.subr.mxu0 0.0
        %592 = vmatpush1.msra.mxu0 0.0
        %593 = vmatprep.subr.mxu0 0.0
        %594 = vmatpush1.msra.mxu0 0.0
        %595 = vmatprep.subr.mxu0 0.0
        %596 = vmatpush1.msra.mxu0 0.0
        %597 = vmatprep.subr.mxu0 0.0
        %598 = vmatpush1.msra.mxu0 0.0
        %599 = vmatprep.subr.mxu0 0.0
        %600 = vmatpush1.msra.mxu0 0.0
        %601 = vmatprep.subr.mxu0 0.0
        %602 = vmatpush1.msra.mxu0 0.0
        %603 = vmatprep.subr.mxu0 0.0
        %604 = vmatpush1.msra.mxu0 0.0
        %605 = vmatprep.subr.mxu0 0.0
        %606 = vmatpush1.msra.mxu0 0.0
        %607 = vmatprep.subr.mxu0 0.0
        %608 = vmatpush1.msra.mxu0 0.0
        %609 = vmatprep.subr.mxu0 0.0
        %610 = vmatpush1.msra.mxu0 0.0
        %611 = vmatprep.subr.mxu0 0.0
        %612 = vmatpush1.msra.mxu0 0.0
        %613 = vmatprep.subr.mxu0 0.0
        %614 = vmatpush1.msra.mxu0 0.0
        %615 = vmatprep.subr.mxu0 0.0
        %616 = vmatpush1.msra.mxu0 0.0
        %617 = vmatprep.subr.mxu0 0.0
        %618 = vmatpush1.msra.mxu0 0.0
        %619 = vmatprep.subr.mxu0 0.0
        %620 = vmatpush1.msra.mxu0 0.0
        %621 = vmatprep.subr.mxu0 0.0
        %622 = vmatpush1.msra.mxu0 0.0
        %623 = vmatprep.subr.mxu0 0.0
        %624 = vmatpush1.msra.mxu0 0.0
        %625 = vmatprep.subr.mxu0 0.0
        %626 = vmatpush1.msra.mxu0 0.0
        %627 = vmatprep.subr.mxu0 0.0
        %628 = vmatpush1.msra.mxu0 0.0
        %629 = vmatprep.mubr.f32.mxu0 0.0
        %630 = vmatmul.mubr.f32.gmra.mrb[0].mxu0 %v391
        %v631 = vpop.f32.mrb[0].mxu0
        %v632 = vadd.f32 %v377, %v631
        %v633 = vpop.f32.mrb[0].mxu0
        %v634 = vadd.f32 %v377, %v633
        %635 = vmatprep.mubr.f32.mxu0 0.0
        %636 = vmatmul.mubr.f32.gmra.mrb[0].mxu0 %v394
        %v637 = vpop.f32.mrb[0].mxu0
        %v638 = vadd.f32 %v382, %v637
        %v639 = vpop.f32.mrb[0].mxu0
        %v640 = vadd.f32 %v382, %v639
        %641 = vmatprep.mubr.f32.mxu0 0.0
        %642 = vmatmul.mubr.f32.gmra.mrb[0].mxu0 %v397
        %v643 = vpop.f32.mrb[0].mxu0
        %v644 = vadd.f32 %v387, %v643
        %v645 = vpop.f32.mrb[0].mxu0
        %v646 = vadd.f32 %v387, %v645
        %647 = vdwg.mxu0
        %648 = vmatprep.subr.mxu0 %v234
        %649 = vmatpush1.msra.mxu0 %v233
        %650 = vmatprep.subr.mxu0 %v250
        %651 = vmatpush1.msra.mxu0 %v249
        %652 = vmatprep.subr.mxu0 %v266
        %653 = vmatpush1.msra.mxu0 %v265
        %654 = vmatprep.subr.mxu0 %v282
        %655 = vmatpush1.msra.mxu0 %v281
        %656 = vmatprep.subr.mxu0 %v298
        %657 = vmatpush1.msra.mxu0 %v297
        %658 = vmatprep.subr.mxu0 %v314
        %659 = vmatpush1.msra.mxu0 %v313
        %660 = vmatprep.subr.mxu0 %v330
        %661 = vmatpush1.msra.mxu0 %v329
        %662 = vmatprep.subr.mxu0 %v346
        %663 = vmatpush1.msra.mxu0 %v345
        %664 = vmatprep.subr.mxu0 %v362
        %665 = vmatpush1.msra.mxu0 %v361
        %666 = vmatprep.subr.mxu0 0.0
        %667 = vmatpush1.msra.mxu0 0.0
        %668 = vmatprep.subr.mxu0 0.0
        %669 = vmatpush1.msra.mxu0 0.0
        %670 = vmatprep.subr.mxu0 0.0
        %671 = vmatpush1.msra.mxu0 0.0
        %672 = vmatprep.subr.mxu0 0.0
        %673 = vmatpush1.msra.mxu0 0.0
        %674 = vmatprep.subr.mxu0 0.0
        %675 = vmatpush1.msra.mxu0 0.0
        %676 = vmatprep.subr.mxu0 0.0
        %677 = vmatpush1.msra.mxu0 0.0
        %678 = vmatprep.subr.mxu0 0.0
        %679 = vmatpush1.msra.mxu0 0.0
        %680 = vmatprep.subr.mxu0 0.0
        %681 = vmatpush1.msra.mxu0 0.0
        %682 = vmatprep.subr.mxu0 0.0
        %683 = vmatpush1.msra.mxu0 0.0
        %684 = vmatprep.subr.mxu0 0.0
        %685 = vmatpush1.msra.mxu0 0.0
        %686 = vmatprep.subr.mxu0 0.0
        %687 = vmatpush1.msra.mxu0 0.0
        %688 = vmatprep.subr.mxu0 0.0
        %689 = vmatpush1.msra.mxu0 0.0
        %690 = vmatprep.subr.mxu0 0.0
        %691 = vmatpush1.msra.mxu0 0.0
        %692 = vmatprep.subr.mxu0 0.0
        %693 = vmatpush1.msra.mxu0 0.0
        %694 = vmatprep.subr.mxu0 0.0
        %695 = vmatpush1.msra.mxu0 0.0
        %696 = vmatprep.subr.mxu0 0.0
        %697 = vmatpush1.msra.mxu0 0.0
        %698 = vmatprep.subr.mxu0 0.0
        %699 = vmatpush1.msra.mxu0 0.0
        %700 = vmatprep.subr.mxu0 0.0
        %701 = vmatpush1.msra.mxu0 0.0
        %702 = vmatprep.subr.mxu0 0.0
        %703 = vmatpush1.msra.mxu0 0.0
        %704 = vmatprep.subr.mxu0 0.0
        %705 = vmatpush1.msra.mxu0 0.0
        %706 = vmatprep.subr.mxu0 0.0
        %707 = vmatpush1.msra.mxu0 0.0
        %708 = vmatprep.subr.mxu0 0.0
        %709 = vmatpush1.msra.mxu0 0.0
        %710 = vmatprep.subr.mxu0 0.0
        %711 = vmatpush1.msra.mxu0 0.0
        %712 = vmatprep.mubr.f32.mxu0 0.0
        %713 = vmatmul.mubr.f32.gmra.mrb[0].mxu0 %v391
        %v714 = vpop.f32.mrb[0].mxu0
        %v715 = vadd.f32 %v377, %v714
        %v716 = vpop.f32.mrb[0].mxu0
        %v717 = vadd.f32 %v377, %v716
        %718 = vmatprep.mubr.f32.mxu0 0.0
        %719 = vmatmul.mubr.f32.gmra.mrb[0].mxu0 %v394
        %v720 = vpop.f32.mrb[0].mxu0
        %v721 = vadd.f32 %v382, %v720
        %v722 = vpop.f32.mrb[0].mxu0
        %v723 = vadd.f32 %v382, %v722
        %724 = vmatprep.mubr.f32.mxu0 0.0
        %725 = vmatmul.mubr.f32.gmra.mrb[0].mxu0 %v397
        %v726 = vpop.f32.mrb[0].mxu0
        %v727 = vadd.f32 %v387, %v726
        %v728 = vpop.f32.mrb[0].mxu0
        %v729 = vadd.f32 %v387, %v728
        %730 = vdwg.mxu0
        %731 = vmatprep.subr.mxu0 %v236
        %732 = vmatpush1.msra.mxu0 %v235
        %733 = vmatprep.subr.mxu0 %v252
        %734 = vmatpush1.msra.mxu0 %v251
        %735 = vmatprep.subr.mxu0 %v268
        %736 = vmatpush1.msra.mxu0 %v267
        %737 = vmatprep.subr.mxu0 %v284
        %738 = vmatpush1.msra.mxu0 %v283
        %739 = vmatprep.subr.mxu0 %v300
        %740 = vmatpush1.msra.mxu0 %v299
        %741 = vmatprep.subr.mxu0 %v316
        %742 = vmatpush1.msra.mxu0 %v315
        %743 = vmatprep.subr.mxu0 %v332
        %744 = vmatpush1.msra.mxu0 %v331
        %745 = vmatprep.subr.mxu0 %v348
        %746 = vmatpush1.msra.mxu0 %v347
        %747 = vmatprep.subr.mxu0 %v364
        %748 = vmatpush1.msra.mxu0 %v363
        %749 = vmatprep.subr.mxu0 0.0
        %750 = vmatpush1.msra.mxu0 0.0
        %751 = vmatprep.subr.mxu0 0.0
        %752 = vmatpush1.msra.mxu0 0.0
        %753 = vmatprep.subr.mxu0 0.0
        %754 = vmatpush1.msra.mxu0 0.0
        %755 = vmatprep.subr.mxu0 0.0
        %756 = vmatpush1.msra.mxu0 0.0
        %757 = vmatprep.subr.mxu0 0.0
        %758 = vmatpush1.msra.mxu0 0.0
        %759 = vmatprep.subr.mxu0 0.0
        %760 = vmatpush1.msra.mxu0 0.0
        %761 = vmatprep.subr.mxu0 0.0
        %762 = vmatpush1.msra.mxu0 0.0
        %763 = vmatprep.subr.mxu0 0.0
        %764 = vmatpush1.msra.mxu0 0.0
        %765 = vmatprep.subr.mxu0 0.0
        %766 = vmatpush1.msra.mxu0 0.0
        %767 = vmatprep.subr.mxu0 0.0
        %768 = vmatpush1.msra.mxu0 0.0
        %769 = vmatprep.subr.mxu0 0.0
        %770 = vmatpush1.msra.mxu0 0.0
        %771 = vmatprep.subr.mxu0 0.0
        %772 = vmatpush1.msra.mxu0 0.0
        %773 = vmatprep.subr.mxu0 0.0
        %774 = vmatpush1.msra.mxu0 0.0
        %775 = vmatprep.subr.mxu0 0.0
        %776 = vmatpush1.msra.mxu0 0.0
        %777 = vmatprep.subr.mxu0 0.0
        %778 = vmatpush1.msra.mxu0 0.0
        %779 = vmatprep.subr.mxu0 0.0
        %780 = vmatpush1.msra.mxu0 0.0
        %781 = vmatprep.subr.mxu0 0.0
        %782 = vmatpush1.msra.mxu0 0.0
        %783 = vmatprep.subr.mxu0 0.0
        %784 = vmatpush1.msra.mxu0 0.0
        %785 = vmatprep.subr.mxu0 0.0
        %786 = vmatpush1.msra.mxu0 0.0
        %787 = vmatprep.subr.mxu0 0.0
        %788 = vmatpush1.msra.mxu0 0.0
        %789 = vmatprep.subr.mxu0 0.0
        %790 = vmatpush1.msra.mxu0 0.0
        %791 = vmatprep.subr.mxu0 0.0
        %792 = vmatpush1.msra.mxu0 0.0
        %793 = vmatprep.subr.mxu0 0.0
        %794 = vmatpush1.msra.mxu0 0.0
        %795 = vmatprep.mubr.f32.mxu0 0.0
        %796 = vmatmul.mubr.f32.gmra.mrb[0].mxu0 %v391
        %v797 = vpop.f32.mrb[0].mxu0
        %v798 = vadd.f32 %v377, %v797
        %v799 = vpop.f32.mrb[0].mxu0
        %v800 = vadd.f32 %v377, %v799
        %801 = vmatprep.mubr.f32.mxu0 0.0
        %802 = vmatmul.mubr.f32.gmra.mrb[0].mxu0 %v394
        %v803 = vpop.f32.mrb[0].mxu0
        %v804 = vadd.f32 %v382, %v803
        %v805 = vpop.f32.mrb[0].mxu0
        %v806 = vadd.f32 %v382, %v805
        %807 = vmatprep.mubr.f32.mxu0 0.0
        %808 = vmatmul.mubr.f32.gmra.mrb[0].mxu0 %v397
        %v809 = vpop.f32.mrb[0].mxu0
        %v810 = vadd.f32 %v387, %v809
        %v811 = vpop.f32.mrb[0].mxu0
        %v812 = vadd.f32 %v387, %v811
        %813 = vdwg.mxu0
        %814 = vmatprep.subr.mxu0 %v238
        %815 = vmatpush1.msra.mxu0 %v237
        %816 = vmatprep.subr.mxu0 %v254
        %817 = vmatpush1.msra.mxu0 %v253
        %818 = vmatprep.subr.mxu0 %v270
        %819 = vmatpush1.msra.mxu0 %v269
        %820 = vmatprep.subr.mxu0 %v286
        %821 = vmatpush1.msra.mxu0 %v285
        %822 = vmatprep.subr.mxu0 %v302
        %823 = vmatpush1.msra.mxu0 %v301
        %824 = vmatprep.subr.mxu0 %v318
        %825 = vmatpush1.msra.mxu0 %v317
        %826 = vmatprep.subr.mxu0 %v334
        %827 = vmatpush1.msra.mxu0 %v333
        %828 = vmatprep.subr.mxu0 %v350
        %829 = vmatpush1.msra.mxu0 %v349
        %830 = vmatprep.subr.mxu0 %v366
        %831 = vmatpush1.msra.mxu0 %v365
        %832 = vmatprep.subr.mxu0 0.0
        %833 = vmatpush1.msra.mxu0 0.0
        %834 = vmatprep.subr.mxu0 0.0
        %835 = vmatpush1.msra.mxu0 0.0
        %836 = vmatprep.subr.mxu0 0.0
        %837 = vmatpush1.msra.mxu0 0.0
        %838 = vmatprep.subr.mxu0 0.0
        %839 = vmatpush1.msra.mxu0 0.0
        %840 = vmatprep.subr.mxu0 0.0
        %841 = vmatpush1.msra.mxu0 0.0
        %842 = vmatprep.subr.mxu0 0.0
        %843 = vmatpush1.msra.mxu0 0.0
        %844 = vmatprep.subr.mxu0 0.0
        %845 = vmatpush1.msra.mxu0 0.0
        %846 = vmatprep.subr.mxu0 0.0
        %847 = vmatpush1.msra.mxu0 0.0
        %848 = vmatprep.subr.mxu0 0.0
        %849 = vmatpush1.msra.mxu0 0.0
        %850 = vmatprep.subr.mxu0 0.0
        %851 = vmatpush1.msra.mxu0 0.0
        %852 = vmatprep.subr.mxu0 0.0
        %853 = vmatpush1.msra.mxu0 0.0
        %854 = vmatprep.subr.mxu0 0.0
        %855 = vmatpush1.msra.mxu0 0.0
        %856 = vmatprep.subr.mxu0 0.0
        %857 = vmatpush1.msra.mxu0 0.0
        %858 = vmatprep.subr.mxu0 0.0
        %859 = vmatpush1.msra.mxu0 0.0
        %860 = vmatprep.subr.mxu0 0.0
        %861 = vmatpush1.msra.mxu0 0.0
        %862 = vmatprep.subr.mxu0 0.0
        %863 = vmatpush1.msra.mxu0 0.0
        %864 = vmatprep.subr.mxu0 0.0
        %865 = vmatpush1.msra.mxu0 0.0
        %866 = vmatprep.subr.mxu0 0.0
        %867 = vmatpush1.msra.mxu0 0.0
        %868 = vmatprep.subr.mxu0 0.0
        %869 = vmatpush1.msra.mxu0 0.0
        %870 = vmatprep.subr.mxu0 0.0
        %871 = vmatpush1.msra.mxu0 0.0
        %872 = vmatprep.subr.mxu0 0.0
        %873 = vmatpush1.msra.mxu0 0.0
        %874 = vmatprep.subr.mxu0 0.0
        %875 = vmatpush1.msra.mxu0 0.0
        %876 = vmatprep.subr.mxu0 0.0
        %877 = vmatpush1.msra.mxu0 0.0
        %878 = vmatprep.mubr.f32.mxu0 0.0
        %879 = vmatmul.mubr.f32.gmra.mrb[0].mxu0 %v391
        %v880 = vpop.f32.mrb[0].mxu0
        %v881 = vadd.f32 %v377, %v880
        %v882 = vpop.f32.mrb[0].mxu0
        %v883 = vadd.f32 %v377, %v882
        %884 = vmatprep.mubr.f32.mxu0 0.0
        %885 = vmatmul.mubr.f32.gmra.mrb[0].mxu0 %v394
        %v886 = vpop.f32.mrb[0].mxu0
        %v887 = vadd.f32 %v382, %v886
        %v888 = vpop.f32.mrb[0].mxu0
        %v889 = vadd.f32 %v382, %v888
        %890 = vmatprep.mubr.f32.mxu0 0.0
        %891 = vmatmul.mubr.f32.gmra.mrb[0].mxu0 %v397
        %v892 = vpop.f32.mrb[0].mxu0
        %v893 = vadd.f32 %v387, %v892
        %v894 = vpop.f32.mrb[0].mxu0
        %v895 = vadd.f32 %v387, %v894
        %896 = vdwg.mxu0
        %897 = vmatprep.subr.mxu0 %v240
        %898 = vmatpush1.msra.mxu0 %v239
        %899 = vmatprep.subr.mxu0 %v256
        %900 = vmatpush1.msra.mxu0 %v255
        %901 = vmatprep.subr.mxu0 %v272
        %902 = vmatpush1.msra.mxu0 %v271
        %903 = vmatprep.subr.mxu0 %v288
        %904 = vmatpush1.msra.mxu0 %v287
        %905 = vmatprep.subr.mxu0 %v304
        %906 = vmatpush1.msra.mxu0 %v303
        %907 = vmatprep.subr.mxu0 %v320
        %908 = vmatpush1.msra.mxu0 %v319
        %909 = vmatprep.subr.mxu0 %v336
        %910 = vmatpush1.msra.mxu0 %v335
        %911 = vmatprep.subr.mxu0 %v352
        %912 = vmatpush1.msra.mxu0 %v351
        %913 = vmatprep.subr.mxu0 %v368
        %914 = vmatpush1.msra.mxu0 %v367
        %915 = vmatprep.subr.mxu0 0.0
        %916 = vmatpush1.msra.mxu0 0.0
        %917 = vmatprep.subr.mxu0 0.0
        %918 = vmatpush1.msra.mxu0 0.0
        %919 = vmatprep.subr.mxu0 0.0
        %920 = vmatpush1.msra.mxu0 0.0
        %921 = vmatprep.subr.mxu0 0.0
        %922 = vmatpush1.msra.mxu0 0.0
        %923 = vmatprep.subr.mxu0 0.0
        %924 = vmatpush1.msra.mxu0 0.0
        %925 = vmatprep.subr.mxu0 0.0
        %926 = vmatpush1.msra.mxu0 0.0
        %927 = vmatprep.subr.mxu0 0.0
        %928 = vmatpush1.msra.mxu0 0.0
        %929 = vmatprep.subr.mxu0 0.0
        %930 = vmatpush1.msra.mxu0 0.0
        %931 = vmatprep.subr.mxu0 0.0
        %932 = vmatpush1.msra.mxu0 0.0
        %933 = vmatprep.subr.mxu0 0.0
        %934 = vmatpush1.msra.mxu0 0.0
        %935 = vmatprep.subr.mxu0 0.0
        %936 = vmatpush1.msra.mxu0 0.0
        %937 = vmatprep.subr.mxu0 0.0
        %938 = vmatpush1.msra.mxu0 0.0
        %939 = vmatprep.subr.mxu0 0.0
        %940 = vmatpush1.msra.mxu0 0.0
        %941 = vmatprep.subr.mxu0 0.0
        %942 = vmatpush1.msra.mxu0 0.0
        %943 = vmatprep.subr.mxu0 0.0
        %944 = vmatpush1.msra.mxu0 0.0
        %945 = vmatprep.subr.mxu0 0.0
        %946 = vmatpush1.msra.mxu0 0.0
        %947 = vmatprep.subr.mxu0 0.0
        %948 = vmatpush1.msra.mxu0 0.0
        %949 = vmatprep.subr.mxu0 0.0
        %950 = vmatpush1.msra.mxu0 0.0
        %951 = vmatprep.subr.mxu0 0.0
        %952 = vmatpush1.msra.mxu0 0.0
        %953 = vmatprep.subr.mxu0 0.0
        %954 = vmatpush1.msra.mxu0 0.0
        %955 = vmatprep.subr.mxu0 0.0
        %956 = vmatpush1.msra.mxu0 0.0
        %957 = vmatprep.subr.mxu0 0.0
        %958 = vmatpush1.msra.mxu0 0.0
        %959 = vmatprep.subr.mxu0 0.0
        %960 = vmatpush1.msra.mxu0 0.0
        %961 = vmatprep.mubr.f32.mxu0 0.0
        %962 = vmatmul.mubr.f32.gmra.mrb[0].mxu0 %v391
        %v963 = vpop.f32.mrb[0].mxu0
        %v964 = vadd.f32 %v377, %v963
        %v965 = vpop.f32.mrb[0].mxu0
        %v966 = vadd.f32 %v377, %v965
        %967 = vmatprep.mubr.f32.mxu0 0.0
        %968 = vmatmul.mubr.f32.gmra.mrb[0].mxu0 %v394
        %v969 = vpop.f32.mrb[0].mxu0
        %v970 = vadd.f32 %v382, %v969
        %v971 = vpop.f32.mrb[0].mxu0
        %v972 = vadd.f32 %v382, %v971
        %973 = vmatprep.mubr.f32.mxu0 0.0
        %974 = vmatmul.mubr.f32.gmra.mrb[0].mxu0 %v397
        %v975 = vpop.f32.mrb[0].mxu0
        %v976 = vadd.f32 %v387, %v975
        %v977 = vpop.f32.mrb[0].mxu0
        %v978 = vadd.f32 %v387, %v977
        %979 = vdwg.mxu0
        %980 = vmatprep.subr.mxu0 %v242
        %981 = vmatpush1.msra.mxu0 %v241
        %982 = vmatprep.subr.mxu0 %v258
        %983 = vmatpush1.msra.mxu0 %v257
        %984 = vmatprep.subr.mxu0 %v274
        %985 = vmatpush1.msra.mxu0 %v273
        %986 = vmatprep.subr.mxu0 %v290
        %987 = vmatpush1.msra.mxu0 %v289
        %988 = vmatprep.subr.mxu0 %v306
        %989 = vmatpush1.msra.mxu0 %v305
        %990 = vmatprep.subr.mxu0 %v322
        %991 = vmatpush1.msra.mxu0 %v321
        %992 = vmatprep.subr.mxu0 %v338
        %993 = vmatpush1.msra.mxu0 %v337
        %994 = vmatprep.subr.mxu0 %v354
        %995 = vmatpush1.msra.mxu0 %v353
        %996 = vmatprep.subr.mxu0 %v370
        %997 = vmatpush1.msra.mxu0 %v369
        %998 = vmatprep.subr.mxu0 0.0
        %999 = vmatpush1.msra.mxu0 0.0
        %1000 = vmatprep.subr.mxu0 0.0
        %1001 = vmatpush1.msra.mxu0 0.0
        %1002 = vmatprep.subr.mxu0 0.0
        %1003 = vmatpush1.msra.mxu0 0.0
        %1004 = vmatprep.subr.mxu0 0.0
        %1005 = vmatpush1.msra.mxu0 0.0
        %1006 = vmatprep.subr.mxu0 0.0
        %1007 = vmatpush1.msra.mxu0 0.0
        %1008 = vmatprep.subr.mxu0 0.0
        %1009 = vmatpush1.msra.mxu0 0.0
        %1010 = vmatprep.subr.mxu0 0.0
        %1011 = vmatpush1.msra.mxu0 0.0
        %1012 = vmatprep.subr.mxu0 0.0
        %1013 = vmatpush1.msra.mxu0 0.0
        %1014 = vmatprep.subr.mxu0 0.0
        %1015 = vmatpush1.msra.mxu0 0.0
        %1016 = vmatprep.subr.mxu0 0.0
        %1017 = vmatpush1.msra.mxu0 0.0
        %1018 = vmatprep.subr.mxu0 0.0
        %1019 = vmatpush1.msra.mxu0 0.0
        %1020 = vmatprep.subr.mxu0 0.0
        %1021 = vmatpush1.msra.mxu0 0.0
        %1022 = vmatprep.subr.mxu0 0.0
        %1023 = vmatpush1.msra.mxu0 0.0
        %1024 = vmatprep.subr.mxu0 0.0
        %1025 = vmatpush1.msra.mxu0 0.0
        %1026 = vmatprep.subr.mxu0 0.0
        %1027 = vmatpush1.msra.mxu0 0.0
        %1028 = vmatprep.subr.mxu0 0.0
        %1029 = vmatpush1.msra.mxu0 0.0
        %1030 = vmatprep.subr.mxu0 0.0
        %1031 = vmatpush1.msra.mxu0 0.0
        %1032 = vmatprep.subr.mxu0 0.0
        %1033 = vmatpush1.msra.mxu0 0.0
        %1034 = vmatprep.subr.mxu0 0.0
        %1035 = vmatpush1.msra.mxu0 0.0
        %1036 = vmatprep.subr.mxu0 0.0
        %1037 = vmatpush1.msra.mxu0 0.0
        %1038 = vmatprep.subr.mxu0 0.0
        %1039 = vmatpush1.msra.mxu0 0.0
        %1040 = vmatprep.subr.mxu0 0.0
        %1041 = vmatpush1.msra.mxu0 0.0
        %1042 = vmatprep.subr.mxu0 0.0
        %1043 = vmatpush1.msra.mxu0 0.0
        %1044 = vmatprep.mubr.f32.mxu0 0.0
        %1045 = vmatmul.mubr.f32.gmra.mrb[0].mxu0 %v391
        %v1046 = vpop.f32.mrb[0].mxu0
        %v1047 = vadd.f32 %v377, %v1046
        %v1048 = vpop.f32.mrb[0].mxu0
        %v1049 = vadd.f32 %v377, %v1048
        %1050 = vmatprep.mubr.f32.mxu0 0.0
        %1051 = vmatmul.mubr.f32.gmra.mrb[0].mxu0 %v394
        %v1052 = vpop.f32.mrb[0].mxu0
        %v1053 = vadd.f32 %v382, %v1052
        %v1054 = vpop.f32.mrb[0].mxu0
        %v1055 = vadd.f32 %v382, %v1054
        %1056 = vmatprep.mubr.f32.mxu0 0.0
        %1057 = vmatmul.mubr.f32.gmra.mrb[0].mxu0 %v397
        %v1058 = vpop.f32.mrb[0].mxu0
        %v1059 = vadd.f32 %v387, %v1058
        %v1060 = vpop.f32.mrb[0].mxu0
        %v1061 = vadd.f32 %v387, %v1060
        %1062 = vdwg.mxu0
        %1063 = vst [vmem:[%s221] sm:$0xff] %v466
        %1064 = vst [vmem:[%s221 + $0x8] sm:$0xff] %v468
        %1065 = vst [vmem:[%s221 + $0x10] sm:$0xff] %v549
        %1066 = vst [vmem:[%s221 + $0x18] sm:$0xff] %v551
        %1067 = vst [vmem:[%s221 + $0x20] sm:$0xff] %v632
        %1068 = vst [vmem:[%s221 + $0x28] sm:$0xff] %v634
        %1069 = vst [vmem:[%s221 + $0x30] sm:$0xff] %v715
        %1070 = vst [vmem:[%s221 + $0x38] sm:$0xff] %v717
        %1071 = vst [vmem:[%s221 + $0x40] sm:$0xff] %v798
        %1072 = vst [vmem:[%s221 + $0x48] sm:$0xff] %v800
        %1073 = vst [vmem:[%s221 + $0x50] sm:$0xff] %v881
        %1074 = vst [vmem:[%s221 + $0x58] sm:$0xff] %v883
        %1075 = vst [vmem:[%s221 + $0x60] sm:$0xff] %v964
        %1076 = vst [vmem:[%s221 + $0x68] sm:$0xff] %v966
        %1077 = vst [vmem:[%s221 + $0x70] sm:$0xff] %v1047
        %1078 = vst [vmem:[%s221 + $0x78] sm:$0xff] %v1049
        %1079 = vst [vmem:[%s221 + $0x80] sm:$0xff] %v472
        %1080 = vst [vmem:[%s221 + $0x88] sm:$0xff] %v474
        %1081 = vst [vmem:[%s221 + $0x90] sm:$0xff] %v555
        %1082 = vst [vmem:[%s221 + $0x98] sm:$0xff] %v557
        %1083 = vst [vmem:[%s221 + $0xa0] sm:$0xff] %v638
        %1084 = vst [vmem:[%s221 + $0xa8] sm:$0xff] %v640
        %1085 = vst [vmem:[%s221 + $0xb0] sm:$0xff] %v721
        %1086 = vst [vmem:[%s221 + $0xb8] sm:$0xff] %v723
        %1087 = vst [vmem:[%s221 + $0xc0] sm:$0xff] %v804
        %1088 = vst [vmem:[%s221 + $0xc8] sm:$0xff] %v806
        %1089 = vst [vmem:[%s221 + $0xd0] sm:$0xff] %v887
        %1090 = vst [vmem:[%s221 + $0xd8] sm:$0xff] %v889
        %1091 = vst [vmem:[%s221 + $0xe0] sm:$0xff] %v970
        %1092 = vst [vmem:[%s221 + $0xe8] sm:$0xff] %v972
        %1093 = vst [vmem:[%s221 + $0xf0] sm:$0xff] %v1053
        %1094 = vst [vmem:[%s221 + $0xf8] sm:$0xff] %v1055
        %1095 = vst [vmem:[%s221 + $0x100] sm:$0xff] %v478
        %1096 = vst [vmem:[%s221 + $0x108] sm:$0xff] %v480
        %1097 = vst [vmem:[%s221 + $0x110] sm:$0xff] %v561
        %1098 = vst [vmem:[%s221 + $0x118] sm:$0xff] %v563
        %1099 = vst [vmem:[%s221 + $0x120] sm:$0xff] %v644
        %1100 = vst [vmem:[%s221 + $0x128] sm:$0xff] %v646
        %1101 = vst [vmem:[%s221 + $0x130] sm:$0xff] %v727
        %1102 = vst [vmem:[%s221 + $0x138] sm:$0xff] %v729
        %1103 = vst [vmem:[%s221 + $0x140] sm:$0xff] %v810
        %1104 = vst [vmem:[%s221 + $0x148] sm:$0xff] %v812
        %1105 = vst [vmem:[%s221 + $0x150] sm:$0xff] %v893
        %1106 = vst [vmem:[%s221 + $0x158] sm:$0xff] %v895
        %1107 = vst [vmem:[%s221 + $0x160] sm:$0xff] %v976
        %1108 = vst [vmem:[%s221 + $0x168] sm:$0xff] %v978
        %1109 = vst [vmem:[%s221 + $0x170] sm:$0xff] %v1059
        %1110 = vst [vmem:[%s221 + $0x178] sm:$0xff] %v1061
        %s1111 = sand.u32 %s113, 1
        %s1112 = scalar_lea.sflag [#allocation4], %s1111
        %s1113 = sand.u32 %s113, 1
        %s1114 = smul.addr %s1113, 384
        %s1115 = scalar_lea.vmem [#allocation7], %s1114
        // Predicated region
        $region41: #{tpu_custom_call.1} parent=31 // pred_check
          %p1116 = pneg %p123
        $region42: #{tpu_custom_call.1} parent=31 // pred_check_branch
          %1118 = sbr.rel (%p1116) target = $region44
        $region43: #{tpu_custom_call.1} parent=31 // pred_region
          %s1119 = smul.u32 16, %s26
          %s1121 = ssub.s32 6144, 6144
          %1122 = vsyncadd %s1112, %s1121
          %s1123 = smul.addr %s25, 96
          %s1124 = sadd.s32 %s1119, %s1123
          %s1125 = smul.addr %s1124, 128
          %s1126 = scalar_lea.hbm %s3, %s1125
          %s1127 = sshll.u32 %s1115, 4
          %s1128 = int_to_ptr.vmem [resolvable:$true] %s1127
          %1133 = dma.vmem_to_hbm [thread:$0]  %s1128, 6144, %s1126, %s1112, 2048, 4096, 128
        $region44: #{tpu_custom_call.1} parent=31 // pred_fallthru
          _
      $region32: #{tpu_custom_call.1} parent=5 // pred_fallthru
        _
      %p1134 = scmp.le.s32.totalorder 2, %s16
      // Predicated region
      $region45: #{tpu_custom_call.1} parent=5 // pred_check
        %p1135 = pneg %p1134
      $region46: #{tpu_custom_call.1} parent=5 // pred_check_branch
        %1137 = sbr.rel (%p1135) target = $region48
      $region47: #{tpu_custom_call.1} parent=5 // pred_region
        %s1138 = ssub.s32 %s16, 2
        // Predicated region
        $region49: #{tpu_custom_call.1} parent=47 // pred_check
          %p1139 = pneg %p129
        $region50: #{tpu_custom_call.1} parent=47 // pred_check_branch
          %1141 = sbr.rel (%p1139) target = $region52
        $region51: #{tpu_custom_call.1} parent=47 // pred_region
          %s1142 = sand.u32 %s114, 1
          %s1143 = scalar_lea.sflag [#allocation4], %s1142
          %s1144 = sand.u32 %s114, 1
          %s1145 = smul.addr %s1144, 384
          %s1146 = scalar_lea.vmem [#allocation7], %s1145
          %1147 = dma.done %s1143, 6144
        $region52: #{tpu_custom_call.1} parent=47 // pred_fallthru
          _
      $region48: #{tpu_custom_call.1} parent=5 // pred_fallthru
        _
    $region6: #{tpu_custom_call.1} parent=1 // loop_footer
      %s20 = sadd.s32 1, %s16
    $region7: #{tpu_custom_call.1} parent=1 // loop_footer_branch
      %15 = sbr.rel target = $region3
    $region8: #{tpu_custom_call.1} parent=1 // loop_exit
      _
    %1148 = vsyncpa [#allocation3], 1
    %s1149 = scalar_lea.sflag [#allocation3], 1
    %1150 = vsyncpa %s1149, 1
    %1151 = vsyncpa [#allocation6], 1
    %1152 = vsyncpa [#allocation4], 1
    %s1153 = scalar_lea.sflag [#allocation4], 1
    %1154 = vsyncpa %s1153, 1

</llo_original>
